<compile_context>
chip_gen: v6e
topology: v6e:2x2x1
jax: 0.10.0
libtpu: 0.0.40
codegen_flags: <defaults>
</compile_context>

<pallas_src>
import functools

import jax
import jax.numpy as jnp
from jax.experimental import pallas as pl
from jax.experimental.pallas import tpu as pltpu

CHN_MID = 32
EPS = 0.1
_P_ROWS = CHN_MID + 1          # 33: rows 0..31 = per-channel params, row 32 = conv3
_P_COLS = CHN_MID + 6          # 38: [w2 (32 cols) | folded conv1 (5 cols) | b2 (1 col)]


def _round_up(x, m):
    return ((x + m - 1) // m) * m


def _dist2logit_kernel(d01_ref, p_ref, out_ref, *, mxu_dtype):
    d01 = d01_ref[...]                       # (2, TP) f32: rows = d0, d1
    d0 = d01[0:1, :]
    d1 = d01[1:2, :]

    # Ratio features with a single reciprocal:
    #   inv = 1/((d0+eps)(d1+eps)); r0 = d0*(d0+eps)*inv; r1 = d1*(d1+eps)*inv
    # approx=True -> EUP vrcp (idle slot); one Newton step restores ~f32 accuracy.
    a = d0 + EPS
    b = d1 + EPS
    prod = a * b
    inv = pl.reciprocal(prod, approx=True)
    inv = inv * (2.0 - prod * inv)           # one Newton refinement step
    r0 = (d0 * a) * inv                      # d0 / (d1 + eps)
    r1 = (d1 * b) * inv                      # d1 / (d0 + eps)

    # (5, TP) feature stack: [d0, d1, r0, r1, 1].  Rows 0-1 come straight from
    # the stacked input; the ones row carries the conv1 bias through the MXU.
    x = jnp.concatenate([d01, r0, r1, jnp.ones_like(d0)], axis=0)

    p = p_ref[...]                           # (33, 38) packed parameters
    w2 = p[0:CHN_MID, 0:CHN_MID]             # (32, 32)
    p1 = p[0:CHN_MID, CHN_MID:CHN_MID + 5]   # (32, 5) folded conv1 weights+bias
    b2 = p[0:CHN_MID, CHN_MID + 5:CHN_MID + 6]          # (32, 1)
    w3 = p[CHN_MID:CHN_MID + 1, 0:CHN_MID]               # (1, 32)
    b3 = p[CHN_MID:CHN_MID + 1, CHN_MID:CHN_MID + 1]     # (1, 1)

    # conv1 (1x1, 5 -> 32) on the MXU, f32 accumulation.
    h = jnp.dot(p1.astype(mxu_dtype), x.astype(mxu_dtype),
                preferred_element_type=jnp.float32)               # (32, TP)
    h = jnp.maximum(h, 0.2 * h)                                   # LeakyReLU(0.2)

    # conv2 (1x1, 32 -> 32) + LeakyReLU(0.2).
    h = jnp.dot(w2.astype(mxu_dtype), h.astype(mxu_dtype),
                preferred_element_type=jnp.float32) + b2
    h = jnp.maximum(h, 0.2 * h)

    # conv3 (1x1, 32 -> 1) + Sigmoid: lane-dense (1, TP) output.
    h = jnp.dot(w3.astype(mxu_dtype), h.astype(mxu_dtype),
                preferred_element_type=jnp.float32) + b3
    out_ref[...] = jax.nn.sigmoid(h).astype(out_ref.dtype)


def _pack_params(params):
    """Pack torch-layout params into one (33, 38) f32 array.

    torch shapes: w1 (32,5), b1 (32,), w2 (32,32), b2 (32,), w3 (1,32), b3 (1,).
    conv1 is algebraically folded: [d0, d1, d0-d1, r0, r1] is linear in
    [d0, d1, r0, r1, 1], so wa = w1[:,0]+w1[:,2], wb = w1[:,1]-w1[:,2].
    """
    w1, b1, w2, b2, w3, b3 = [jnp.asarray(t, jnp.float32) for t in params]
    p1 = jnp.stack([w1[:, 0] + w1[:, 2],      # multiplies d0
                    w1[:, 1] - w1[:, 2],      # multiplies d1
                    w1[:, 3],                 # multiplies d0/(d1+eps)
                    w1[:, 4],                 # multiplies d1/(d0+eps)
                    b1],                      # multiplies the ones row
                   axis=1)                    # (32, 5)
    P = jnp.zeros((_P_ROWS, _P_COLS), jnp.float32)
    P = P.at[0:CHN_MID, 0:CHN_MID].set(w2)
    P = P.at[0:CHN_MID, CHN_MID:CHN_MID + 5].set(p1)
    P = P.at[0:CHN_MID, CHN_MID + 5].set(b2)
    P = P.at[CHN_MID, 0:CHN_MID].set(w3[0])
    P = P.at[CHN_MID, CHN_MID].set(b3[0])
    return P


def dist2logit_forward(d0, d1, params, *, tp=16384, mxu_dtype=jnp.float32):
    """d0, d1: (N, 1, H, W) float32.  Returns (N, 1, H, W) float32.

    tp: target pixels per grid step (lane tile).  16384 keeps each resident
    (32, tp) f32 intermediate at ~2 MiB — comfortable even for v7x's 64 MiB
    VMEM — while amortizing the ~600-cycle per-step overhead.
    mxu_dtype=jnp.bfloat16 gives ~3x fewer MXU passes (largest win on v5e)
    at the cost of looser accuracy; default f32 holds 1e-4 vs the reference.
    """
    N, C, H, W = d0.shape
    assert C == 1 and d1.shape == d0.shape
    M = N * H * W

    P = _pack_params(params)

    # Stacked (2, M) input: one DMA stream, rows 0-1 of the feature stack.
    d01 = jnp.concatenate(
        [jnp.reshape(d0, (1, M)), jnp.reshape(d1, (1, M))], axis=0
    ).astype(jnp.float32)

    # Balanced lane tiles (multiple of 512 lanes).  When splitting, use an
    # even number of blocks so both v7x TensorCores get equal work.  The
    # remainder is handled by Pallas partial blocks (no jnp.pad HBM copy);
    # garbage in padded lanes stays lane-local and is sliced off below.
    if M > tp:
        nblk = pl.cdiv(M, tp)
        nblk += nblk % 2
        tp_eff = _round_up(pl.cdiv(M, nblk), 512)
    else:
        tp_eff = _round_up(M, 128)
    grid = (pl.cdiv(M, tp_eff),)

    cost = pl.CostEstimate(
        flops=2 * M * (5 * CHN_MID + CHN_MID * CHN_MID + CHN_MID),
        transcendentals=2 * M,                   # reciprocal + sigmoid
        bytes_accessed=4 * 3 * M)                # 2 input rows + 1 output row

    kernel = functools.partial(_dist2logit_kernel, mxu_dtype=mxu_dtype)

    out = pl.pallas_call(
        kernel,
        out_shape=jax.ShapeDtypeStruct((1, M), jnp.float32),
        grid=grid,
        in_specs=[
            pl.BlockSpec((2, tp_eff), lambda i: (0, i)),          # stacked d0/d1
            pl.BlockSpec((_P_ROWS, _P_COLS), lambda i: (0, 0)),   # packed params
        ],
        out_specs=pl.BlockSpec((1, tp_eff), lambda i: (0, i)),
        compiler_params=pltpu.CompilerParams(
            dimension_semantics=("parallel",)),
        cost_estimate=cost,
    )(d01, P)

    return jnp.reshape(out, (N, 1, H, W))


def init_params(key, chn_mid=CHN_MID):
    """Deterministic synthetic parameters in PyTorch Conv2d layout (out, in)."""
    k1, k2, k3, k4, k5, k6 = jax.random.split(key, 6)
    w1 = jax.random.normal(k1, (chn_mid, 5), jnp.float32) * 0.2
    b1 = jax.random.normal(k2, (chn_mid,), jnp.float32) * 0.05
    w2 = jax.random.normal(k3, (chn_mid, chn_mid), jnp.float32) * 0.1
    b2 = jax.random.normal(k4, (chn_mid,), jnp.float32) * 0.05
    w3 = jax.random.normal(k5, (1, chn_mid), jnp.float32) * 0.1
    b3 = jax.random.normal(k6, (1,), jnp.float32) * 0.05
    return (w1, b1, w2, b2, w3, b3)


def _reference(d0, d1, params, eps=EPS):
    """Pure-JAX reference mirroring the PyTorch forward (torch weight layout)."""
    w1, b1, w2, b2, w3, b3 = params
    N, _, H, W = d0.shape
    feat = jnp.concatenate([d0, d1, d0 - d1, d0 / (d1 + eps), d1 / (d0 + eps)],
                           axis=1)                                 # (N,5,H,W)
    x = jnp.transpose(feat, (0, 2, 3, 1)).reshape(-1, 5)           # (M,5)
    h = x @ w1.T + b1
    h = jnp.where(h > 0, h, 0.2 * h)
    h = h @ w2.T + b2
    h = jnp.where(h > 0, h, 0.2 * h)
    h = h @ w3.T + b3
    h = jax.nn.sigmoid(h)
    return jnp.transpose(h.reshape(N, H, W, 1), (0, 3, 1, 2))


if __name__ == "__main__":
    key = jax.random.PRNGKey(0)
    kp, k0, k1v = jax.random.split(key, 3)
    params = init_params(kp)

    N, H, W = 2, 16, 16
    # distances are non-negative in LPIPS; use abs of normals
    d0 = jnp.abs(jax.random.normal(k0, (N, 1, H, W), jnp.float32))
    d1 = jnp.abs(jax.random.normal(k1v, (N, 1, H, W), jnp.float32))

    out = dist2logit_forward(d0, d1, params)
    out = jax.block_until_ready(out)

    ref = _reference(d0, d1, params)
    assert out.shape == (N, 1, H, W)
    assert jnp.max(jnp.abs(out - ref)) < 1e-4

    print("KERNEL_OK")
</pallas_src>

<mosaic_0001>
module attributes {stable_mosaic.version = 11 : i64} {
  func.func @_dist2logit_kernel(%arg0: i32, %arg1: memref<2x512xf32, #tpu.memory_space<vmem>>, %arg2: memref<33x38xf32, #tpu.memory_space<vmem>>, %arg3: memref<1x512xf32, #tpu.memory_space<vmem>>) attributes {dimension_semantics = [#tpu.dimension_semantics<parallel>], iteration_bounds = array<i64: 1>, scalar_prefetch = 0 : i64, scratch_operands = 0 : i64, tpu.core_type = #tpu.core_type<tc>, window_params = [{transform_indices = @transform_0, window_bounds = array<i64: 2, 512>}, {pipeline_mode = #tpu.pipeline_mode<synchronous>, transform_indices = @transform_1, window_bounds = array<i64: 33, 38>}, {transform_indices = @transform_2, window_bounds = array<i64: 1, 512>}]} {
    %c0 = arith.constant 0 : index
    %c0_0 = arith.constant 0 : index
    %0 = vector.load %arg1[%c0, %c0_0] : memref<2x512xf32, #tpu.memory_space<vmem>>, vector<2x512xf32>
    %1 = vector.extract_strided_slice %0 {offsets = [0, 0], sizes = [1, 512], strides = [1, 1]} : vector<2x512xf32> to vector<1x512xf32>
    %2 = vector.extract_strided_slice %0 {offsets = [1, 0], sizes = [1, 512], strides = [1, 1]} : vector<2x512xf32> to vector<1x512xf32>
    %cst = arith.constant 1.000000e-01 : f32
    %3 = vector.broadcast %cst : f32 to vector<1x512xf32>
    %4 = arith.addf %1, %3 : vector<1x512xf32>
    %cst_1 = arith.constant 1.000000e-01 : f32
    %5 = vector.broadcast %cst_1 : f32 to vector<1x512xf32>
    %6 = arith.addf %2, %5 : vector<1x512xf32>
    %7 = arith.mulf %4, %6 : vector<1x512xf32>
    %8 = tpu.reciprocal %7 {approx = true} : vector<1x512xf32> -> vector<1x512xf32>
    %9 = arith.mulf %7, %8 : vector<1x512xf32>
    %cst_2 = arith.constant 2.000000e+00 : f32
    %10 = vector.broadcast %cst_2 : f32 to vector<1x512xf32>
    %11 = arith.subf %10, %9 : vector<1x512xf32>
    %12 = arith.mulf %8, %11 : vector<1x512xf32>
    %13 = arith.mulf %1, %4 : vector<1x512xf32>
    %14 = arith.mulf %13, %12 : vector<1x512xf32>
    %15 = arith.mulf %2, %6 : vector<1x512xf32>
    %16 = arith.mulf %15, %12 : vector<1x512xf32>
    %cst_3 = arith.constant 1.000000e+00 : f32
    %17 = vector.broadcast %cst_3 : f32 to vector<1x512xf32>
    %18 = tpu.concatenate %0, %14, %16, %17 in 0 : vector<2x512xf32>, vector<1x512xf32>, vector<1x512xf32>, vector<1x512xf32> -> vector<5x512xf32>
    %c0_4 = arith.constant 0 : index
    %c0_5 = arith.constant 0 : index
    %19 = vector.load %arg2[%c0_4, %c0_5] : memref<33x38xf32, #tpu.memory_space<vmem>>, vector<33x38xf32>
    %20 = vector.extract_strided_slice %19 {offsets = [0, 0], sizes = [32, 32], strides = [1, 1]} : vector<33x38xf32> to vector<32x32xf32>
    %21 = vector.extract_strided_slice %19 {offsets = [0, 32], sizes = [32, 5], strides = [1, 1]} : vector<33x38xf32> to vector<32x5xf32>
    %22 = vector.extract_strided_slice %19 {offsets = [0, 37], sizes = [32, 1], strides = [1, 1]} : vector<33x38xf32> to vector<32x1xf32>
    %23 = vector.extract_strided_slice %19 {offsets = [32, 0], sizes = [1, 32], strides = [1, 1]} : vector<33x38xf32> to vector<1x32xf32>
    %24 = vector.extract_strided_slice %19 {offsets = [32, 32], sizes = [1, 1], strides = [1, 1]} : vector<33x38xf32> to vector<1x1xf32>
    %cst_6 = arith.constant dense<0.000000e+00> : vector<32x512xf32>
    %25 = tpu.matmul %21, %18, %cst_6 {dimension_numbers = #tpu.dot_dimension_numbers<[1], [0], [0], [1], [0, 0, 1, 1], [], []>} : vector<32x5xf32>, vector<5x512xf32>, vector<32x512xf32> -> vector<32x512xf32>
    %cst_7 = arith.constant 2.000000e-01 : f32
    %26 = vector.broadcast %cst_7 : f32 to vector<32x512xf32>
    %27 = arith.mulf %26, %25 : vector<32x512xf32>
    %28 = arith.maximumf %25, %27 : vector<32x512xf32>
    %cst_8 = arith.constant dense<0.000000e+00> : vector<32x512xf32>
    %29 = tpu.matmul %20, %28, %cst_8 {dimension_numbers = #tpu.dot_dimension_numbers<[1], [0], [0], [1], [0, 0, 1, 1], [], []>} : vector<32x32xf32>, vector<32x512xf32>, vector<32x512xf32> -> vector<32x512xf32>
    %30 = vector.broadcast %22 : vector<32x1xf32> to vector<32x512xf32>
    %31 = arith.addf %29, %30 : vector<32x512xf32>
    %cst_9 = arith.constant 2.000000e-01 : f32
    %32 = vector.broadcast %cst_9 : f32 to vector<32x512xf32>
    %33 = arith.mulf %32, %31 : vector<32x512xf32>
    %34 = arith.maximumf %31, %33 : vector<32x512xf32>
    %cst_10 = arith.constant dense<0.000000e+00> : vector<1x512xf32>
    %35 = tpu.matmul %23, %34, %cst_10 {dimension_numbers = #tpu.dot_dimension_numbers<[1], [0], [0], [1], [0, 0, 1, 1], [], []>} : vector<1x32xf32>, vector<32x512xf32>, vector<1x512xf32> -> vector<1x512xf32>
    %36 = vector.broadcast %24 : vector<1x1xf32> to vector<1x512xf32>
    %37 = arith.addf %35, %36 : vector<1x512xf32>
    %38 = arith.negf %37 : vector<1x512xf32>
    %39 = math.exp %38 : vector<1x512xf32>
    %cst_11 = arith.constant 1.000000e+00 : f32
    %40 = vector.broadcast %cst_11 : f32 to vector<1x512xf32>
    %41 = arith.addf %40, %39 : vector<1x512xf32>
    %42 = arith.divf %40, %41 : vector<1x512xf32>
    %c0_12 = arith.constant 0 : index
    %c0_13 = arith.constant 0 : index
    %43 = vector.load %arg3[%c0_12, %c0_13] : memref<1x512xf32, #tpu.memory_space<vmem>>, vector<1x512xf32>
    tpu.vector_store %arg3[%c0_12, %c0_13], %42 {strides = array<i32>} : memref<1x512xf32, #tpu.memory_space<vmem>>, vector<1x512xf32>,
    return
  }
  func.func @transform_0(%arg0: i32) -> (i32, i32) {
    %c0_i32 = arith.constant 0 : i32
    %c0_i32_0 = arith.constant 0 : i32
    return %c0_i32, %arg0 : i32, i32
  }
  func.func @transform_1(%arg0: i32) -> (i32, i32) {
    %c0_i32 = arith.constant 0 : i32
    %c0_i32_0 = arith.constant 0 : i32
    %c0_i32_1 = arith.constant 0 : i32
    return %c0_i32, %c0_i32_0 : i32, i32
  }
  func.func @transform_2(%arg0: i32) -> (i32, i32) {
    %c0_i32 = arith.constant 0 : i32
    %c0_i32_0 = arith.constant 0 : i32
    return %c0_i32, %arg0 : i32, i32
  }
}

</mosaic_0001>

<llo_original>
// kernel: tpu_custom_call.1
$region0: #{tpu_custom_call.1}
  #allocation0 [shape = 'u32[]', space=smem, size = 0x4, offset = 0x4, fixed_abs, tag = 'smem constant byte address 0x4 - core index']
  #allocation1 [shape = 'u32[144,128]{1,0:T(1,128)}', space=vmem, size = 0x12000, scoped, tag = 'internal scratch']
  %s0 = inlined_call_operand.hbm [shape: f32[2,512], index: 0, kind: input, shape index: {}]
  %s1 = inlined_call_operand.hbm [shape: f32[33,38], index: 1, kind: input, shape index: {}]
  %s2 = inlined_call_operand.hbm [shape: f32[1,512], index: 2, kind: output, shape index: {}]
  %s3 = sld [smem:[#allocation0]]
  $region26: #{tpu_custom_call.1} parent=0
    _
  %s5 = ssub.s32 1, %s3
  %s6 = scalar_select 0, %s5, %s3
  $region1: #{tpu_custom_call.1} parent=0
    #allocation2 [shape = 'u8[4096]{0}', space=vmem, size = 0x1000, scoped, tag = 'input window, operand 0, single buffered']
    #allocation3 [shape = 's32[1]{0}', space=sflag, size = 0x4, scoped, tag = 'scoped memory for tpu_custom_call.1']
    #allocation4 [shape = 's32[1]{0}', space=sflag, size = 0x4, scoped, tag = 'scoped memory for tpu_custom_call.1']
    #allocation5 [shape = 'u8[20480]{0}', space=vmem, size = 0x5000, scoped, tag = 'input window, operand 1, single buffered']
    #allocation6 [shape = 's32[1]{0}', space=sflag, size = 0x4, scoped, tag = 'scoped memory for tpu_custom_call.1']
    #allocation7 [shape = 'u8[2048]{0}', space=vmem, size = 0x800, scoped, tag = 'output window, operand 0, single buffered']
    %7 = vsyncpa [#allocation3], 0
    %8 = vsyncpa [#allocation6], 0
    %9 = vsyncpa [#allocation4], 0
    // Predicated region
    $region2: #{tpu_custom_call.1} parent=1 // pred_check
      _
    $region3: #{tpu_custom_call.1} parent=1 // pred_check_branch
      %11 = sbr.rel (0) target = $region5
    $region4: #{tpu_custom_call.1} parent=1 // pred_region
      %s13 = ssub.s32 128, 128
      %14 = vsyncadd [#allocation3], %s13
      %s16 = sshll.u32 [#allocation2], 4
      %s17 = int_to_ptr.vmem [resolvable:$true] %s16
      %19 = dma.hbm_to_vmem [thread:$0]  %s0, 128, %s17, [#allocation3]
    $region5: #{tpu_custom_call.1} parent=1 // pred_fallthru
      _
    // Predicated region
    $region6: #{tpu_custom_call.1} parent=1 // pred_check
      _
    $region7: #{tpu_custom_call.1} parent=1 // pred_check_branch
      %21 = sbr.rel (0) target = $region9
    $region8: #{tpu_custom_call.1} parent=1 // pred_region
      %s23 = ssub.s32 640, 640
      %24 = vsyncadd [#allocation6], %s23
      %s25 = sshll.u32 [#allocation5], 4
      %s26 = int_to_ptr.vmem [resolvable:$true] %s25
      %31 = dma.hbm_to_vmem [thread:$0]  %s1, 640, %s26, [#allocation6], 128, 128, 8
    $region9: #{tpu_custom_call.1} parent=1 // pred_fallthru
      _
    // Predicated region
    $region10: #{tpu_custom_call.1} parent=1 // pred_check
      _
    $region11: #{tpu_custom_call.1} parent=1 // pred_check_branch
      %33 = sbr.rel (0) target = $region13
    $region12: #{tpu_custom_call.1} parent=1 // pred_region
      %34 = dma.done [#allocation3], 128
    $region13: #{tpu_custom_call.1} parent=1 // pred_fallthru
      _
    // Predicated region
    $region14: #{tpu_custom_call.1} parent=1 // pred_check
      _
    $region15: #{tpu_custom_call.1} parent=1 // pred_check_branch
      %36 = sbr.rel (0) target = $region17
    $region16: #{tpu_custom_call.1} parent=1 // pred_region
      %37 = dma.done [#allocation6], 640
    $region17: #{tpu_custom_call.1} parent=1 // pred_fallthru
      _
    %v38 = vld [vmem:[#allocation2] sm:$0xff]
    %v39 = vadd.f32 %v38, 0.1
    %v41 = vrot.slane %v39, 7
    %v42 = vrot.slane %v41, 2
    %v44 = vmul.f32 %v39, %v42
    %v45 = vrcp.pop %v44
    %v46 = vmul.f32 %v44, %v45
    %v47 = vsub.f32 2.0, %v46
    %v48 = vmul.f32 %v45, %v47
    %v49 = vmul.f32 %v38, %v39
    %v50 = vmul.f32 %v49, %v48
    %v52 = vrot.slane %v48, 7
    %v54 = vmul.f32 %v49, %v52
    %v56 = vcombine.high %v38, %v38
    %v58 = vunpack.c.l.s4 1983009808
    %v59 = vunpack.c.0.s8 %v58
    %v60 = vlaneseq
    %v61 = vshrl.u32 %v60, 7
    %v62 = vsub.s32 %v59, %v61
    %v63 = vrot.slane %v38, %v62
    %v65 = vunpack.c.l.s4 1983009808
    %v66 = vunpack.c.0.s8 %v65
    %v67 = vlaneseq
    %v68 = vshrl.u32 %v67, 7
    %v69 = vsub.s32 %v66, %v68
    %v70 = vrot.slane %v56, %v69
    %v71 = vcombine.high %v63, %v63
    %v72 = vcombine.high %v70, %v70
    %v78 = vlaneseq
    %v79 = vshrl.u32 %v78, 7
    %v80 = vsub.s32 0, %v79
    %v81 = vrot.slane %v50, %v80
    %v82 = vlaneseq
    %v83 = vshrl.u32 %v82, 7
    %v84 = vsub.s32 2, %v83
    %v85 = vrot.slane %v50, %v84
    %v86 = vlaneseq
    %v87 = vshrl.u32 %v86, 7
    %v88 = vsub.s32 4, %v87
    %v89 = vrot.slane %v50, %v88
    %v90 = vlaneseq
    %v91 = vshrl.u32 %v90, 7
    %v92 = vsub.s32 6, %v91
    %v93 = vrot.slane %v50, %v92
    %v99 = vlaneseq
    %v100 = vshrl.u32 %v99, 7
    %v101 = vsub.s32 1, %v100
    %v102 = vrot.slane %v54, %v101
    %v103 = vlaneseq
    %v104 = vshrl.u32 %v103, 7
    %v105 = vsub.s32 3, %v104
    %v106 = vrot.slane %v54, %v105
    %v107 = vlaneseq
    %v108 = vshrl.u32 %v107, 7
    %v109 = vsub.s32 5, %v108
    %v110 = vrot.slane %v54, %v109
    %v111 = vlaneseq
    %v112 = vshrl.u32 %v111, 7
    %v113 = vsub.s32 7, %v112
    %v114 = vrot.slane %v54, %v113
    %vm119 = vcmask 1041408
    %v120 = vsel %vm119, %v63, %v81
    %v121 = vsel %vm119, %v71, %v85
    %v122 = vsel %vm119, %v70, %v89
    %v123 = vsel %vm119, %v72, %v93
    %vm124 = vcmask 1042432
    %v125 = vsel %vm124, %v120, %v102
    %v126 = vsel %vm124, %v121, %v106
    %v127 = vsel %vm124, %v122, %v110
    %v128 = vsel %vm124, %v123, %v114
    %vm129 = vcmask 1043456
    %v130 = vsel %vm129, %v125, 1.0
    %v131 = vsel %vm129, %v126, 1.0
    %v132 = vsel %vm129, %v127, 1.0
    %v133 = vsel %vm129, %v128, 1.0
    %v134 = vld [vmem:[#allocation5] sm:$0xff]
    %v135 = vld [vmem:[#allocation5 + $0x8] sm:$0xff]
    %v136 = vld [vmem:[#allocation5 + $0x10] sm:$0xff]
    %v137 = vld [vmem:[#allocation5 + $0x18] sm:$0xff]
    %v138 = vld [vmem:[#allocation5 + $0x20] sm:$0x1]
    %143 = vrot.lane.b32.xlu0 %v134, 96
    %v144 = vpop.permute.xlu0 %143
    %145 = vrot.lane.b32.xlu0 %v135, 96
    %v146 = vpop.permute.xlu0 %145
    %147 = vrot.lane.b32.xlu0 %v136, 96
    %v148 = vpop.permute.xlu0 %147
    %149 = vrot.lane.b32.xlu0 %v137, 96
    %v150 = vpop.permute.xlu0 %149
    %vm151 = vcmask 39936
    %v152 = vsel %vm151, %v144, 0
    %v154 = vsel %vm151, %v146, 0
    %v156 = vsel %vm151, %v148, 0
    %v158 = vsel %vm151, %v150, 0
    %vm160 = vcmask 1044480
    %v162 = vsel %vm160, %v130, 0
    %v165 = vsel %vm160, %v131, 0
    %v168 = vsel %vm160, %v132, 0
    %v171 = vsel %vm160, %v133, 0
    %173 = vmatprep.subr.mxu0 0.0
    %174 = vmatpush1.msra.mxu0 0.0
    %175 = vmatprep.subr.mxu0 0.0
    %176 = vmatpush1.msra.mxu0 0.0
    %177 = vmatprep.subr.mxu0 0.0
    %178 = vmatpush1.msra.mxu0 0.0
    %179 = vmatprep.subr.mxu0 0.0
    %180 = vmatpush1.msra.mxu0 0.0
    %181 = vmatprep.subr.mxu0 0.0
    %182 = vmatpush1.msra.mxu0 0.0
    %183 = vmatprep.subr.mxu0 0.0
    %184 = vmatpush1.msra.mxu0 0.0
    %185 = vmatprep.subr.mxu0 0.0
    %186 = vmatpush1.msra.mxu0 0.0
    %187 = vmatprep.subr.mxu0 0.0
    %188 = vmatpush1.msra.mxu0 0.0
    %189 = vmatprep.subr.mxu0 0.0
    %190 = vmatpush1.msra.mxu0 0.0
    %191 = vmatprep.subr.mxu0 0.0
    %192 = vmatpush1.msra.mxu0 0.0
    %193 = vmatprep.subr.mxu0 0.0
    %194 = vmatpush1.msra.mxu0 0.0
    %195 = vmatprep.subr.mxu0 0.0
    %196 = vmatpush1.msra.mxu0 0.0
    %197 = vmatprep.subr.mxu0 0.0
    %198 = vmatpush1.msra.mxu0 0.0
    %199 = vmatprep.subr.mxu0 0.0
    %200 = vmatpush1.msra.mxu0 0.0
    %201 = vmatprep.subr.mxu0 0.0
    %202 = vmatpush1.msra.mxu0 0.0
    %203 = vmatprep.subr.mxu0 %v165
    %204 = vmatpush1.msra.mxu0 %v162
    %205 = vmatprep.subr.mxu0 0.0
    %206 = vmatpush2.msra.mxu0 0.0
    %207 = vmatprep.subr.mxu0 0.0
    %208 = vmatpush2.msra.mxu0 0.0
    %209 = vmatprep.subr.mxu0 0.0
    %210 = vmatpush2.msra.mxu0 0.0
    %211 = vmatprep.subr.mxu0 0.0
    %212 = vmatpush2.msra.mxu0 0.0
    %213 = vmatprep.subr.mxu0 0.0
    %214 = vmatpush2.msra.mxu0 0.0
    %215 = vmatprep.subr.mxu0 0.0
    %216 = vmatpush2.msra.mxu0 0.0
    %217 = vmatprep.subr.mxu0 0.0
    %218 = vmatpush2.msra.mxu0 0.0
    %219 = vmatprep.subr.mxu0 0.0
    %220 = vmatpush2.msra.mxu0 0.0
    %221 = vmatprep.subr.mxu0 0.0
    %222 = vmatpush2.msra.mxu0 0.0
    %223 = vmatprep.subr.mxu0 0.0
    %224 = vmatpush2.msra.mxu0 0.0
    %225 = vmatprep.subr.mxu0 0.0
    %226 = vmatpush2.msra.mxu0 0.0
    %227 = vmatprep.subr.mxu0 0.0
    %228 = vmatpush2.msra.mxu0 0.0
    %229 = vmatprep.subr.mxu0 0.0
    %230 = vmatpush2.msra.mxu0 0.0
    %231 = vmatprep.subr.mxu0 0.0
    %232 = vmatpush2.msra.mxu0 0.0
    %233 = vmatprep.subr.mxu0 0.0
    %234 = vmatpush2.msra.mxu0 0.0
    %235 = vmatprep.subr.mxu0 0.0
    %236 = vmatpush2.msra.mxu0 0.0
    %237 = vmatprep.mubr.f32.mxu0 0.0
    %238 = vmatmul.mubr.f32.gmra.mxu0 %v152
    %v239 = vpop.f32.mrf.mxu0
    %v240 = vadd.f32 0.0, %v239
    %v241 = vpop.f32.mrf.mxu0
    %v242 = vadd.f32 0.0, %v241
    %243 = vmatprep.mubr.f32.mxu0 0.0
    %244 = vmatmul.mubr.f32.gmra.mxu0 %v154
    %v245 = vpop.f32.mrf.mxu0
    %v246 = vadd.f32 0.0, %v245
    %v247 = vpop.f32.mrf.mxu0
    %v248 = vadd.f32 0.0, %v247
    %249 = vmatprep.mubr.f32.mxu0 0.0
    %250 = vmatmul.mubr.f32.gmra.mxu0 %v156
    %v251 = vpop.f32.mrf.mxu0
    %v252 = vadd.f32 0.0, %v251
    %v253 = vpop.f32.mrf.mxu0
    %v254 = vadd.f32 0.0, %v253
    %255 = vmatprep.mubr.f32.mxu0 0.0
    %256 = vmatmul.mubr.f32.gmra.mxu0 %v158
    %v257 = vpop.f32.mrf.mxu0
    %v258 = vadd.f32 0.0, %v257
    %v259 = vpop.f32.mrf.mxu0
    %v260 = vadd.f32 0.0, %v259
    %261 = vdwg.mxu0
    %262 = vmatprep.subr.mxu0 0.0
    %263 = vmatpush1.msra.mxu0 0.0
    %264 = vmatprep.subr.mxu0 0.0
    %265 = vmatpush1.msra.mxu0 0.0
    %266 = vmatprep.subr.mxu0 0.0
    %267 = vmatpush1.msra.mxu0 0.0
    %268 = vmatprep.subr.mxu0 0.0
    %269 = vmatpush1.msra.mxu0 0.0
    %270 = vmatprep.subr.mxu0 0.0
    %271 = vmatpush1.msra.mxu0 0.0
    %272 = vmatprep.subr.mxu0 0.0
    %273 = vmatpush1.msra.mxu0 0.0
    %274 = vmatprep.subr.mxu0 0.0
    %275 = vmatpush1.msra.mxu0 0.0
    %276 = vmatprep.subr.mxu0 0.0
    %277 = vmatpush1.msra.mxu0 0.0
    %278 = vmatprep.subr.mxu0 0.0
    %279 = vmatpush1.msra.mxu0 0.0
    %280 = vmatprep.subr.mxu0 0.0
    %281 = vmatpush1.msra.mxu0 0.0
    %282 = vmatprep.subr.mxu0 0.0
    %283 = vmatpush1.msra.mxu0 0.0
    %284 = vmatprep.subr.mxu0 0.0
    %285 = vmatpush1.msra.mxu0 0.0
    %286 = vmatprep.subr.mxu0 0.0
    %287 = vmatpush1.msra.mxu0 0.0
    %288 = vmatprep.subr.mxu0 0.0
    %289 = vmatpush1.msra.mxu0 0.0
    %290 = vmatprep.subr.mxu0 0.0
    %291 = vmatpush1.msra.mxu0 0.0
    %292 = vmatprep.subr.mxu0 %v171
    %293 = vmatpush1.msra.mxu0 %v168
    %294 = vmatprep.subr.mxu0 0.0
    %295 = vmatpush2.msra.mxu0 0.0
    %296 = vmatprep.subr.mxu0 0.0
    %297 = vmatpush2.msra.mxu0 0.0
    %298 = vmatprep.subr.mxu0 0.0
    %299 = vmatpush2.msra.mxu0 0.0
    %300 = vmatprep.subr.mxu0 0.0
    %301 = vmatpush2.msra.mxu0 0.0
    %302 = vmatprep.subr.mxu0 0.0
    %303 = vmatpush2.msra.mxu0 0.0
    %304 = vmatprep.subr.mxu0 0.0
    %305 = vmatpush2.msra.mxu0 0.0
    %306 = vmatprep.subr.mxu0 0.0
    %307 = vmatpush2.msra.mxu0 0.0
    %308 = vmatprep.subr.mxu0 0.0
    %309 = vmatpush2.msra.mxu0 0.0
    %310 = vmatprep.subr.mxu0 0.0
    %311 = vmatpush2.msra.mxu0 0.0
    %312 = vmatprep.subr.mxu0 0.0
    %313 = vmatpush2.msra.mxu0 0.0
    %314 = vmatprep.subr.mxu0 0.0
    %315 = vmatpush2.msra.mxu0 0.0
    %316 = vmatprep.subr.mxu0 0.0
    %317 = vmatpush2.msra.mxu0 0.0
    %318 = vmatprep.subr.mxu0 0.0
    %319 = vmatpush2.msra.mxu0 0.0
    %320 = vmatprep.subr.mxu0 0.0
    %321 = vmatpush2.msra.mxu0 0.0
    %322 = vmatprep.subr.mxu0 0.0
    %323 = vmatpush2.msra.mxu0 0.0
    %324 = vmatprep.subr.mxu0 0.0
    %325 = vmatpush2.msra.mxu0 0.0
    %326 = vmatprep.mubr.f32.mxu0 0.0
    %327 = vmatmul.mubr.f32.gmra.mxu0 %v152
    %v328 = vpop.f32.mrf.mxu0
    %v329 = vadd.f32 0.0, %v328
    %v330 = vpop.f32.mrf.mxu0
    %v331 = vadd.f32 0.0, %v330
    %332 = vmatprep.mubr.f32.mxu0 0.0
    %333 = vmatmul.mubr.f32.gmra.mxu0 %v154
    %v334 = vpop.f32.mrf.mxu0
    %v335 = vadd.f32 0.0, %v334
    %v336 = vpop.f32.mrf.mxu0
    %v337 = vadd.f32 0.0, %v336
    %338 = vmatprep.mubr.f32.mxu0 0.0
    %339 = vmatmul.mubr.f32.gmra.mxu0 %v156
    %v340 = vpop.f32.mrf.mxu0
    %v341 = vadd.f32 0.0, %v340
    %v342 = vpop.f32.mrf.mxu0
    %v343 = vadd.f32 0.0, %v342
    %344 = vmatprep.mubr.f32.mxu0 0.0
    %345 = vmatmul.mubr.f32.gmra.mxu0 %v158
    %v346 = vpop.f32.mrf.mxu0
    %v347 = vadd.f32 0.0, %v346
    %v348 = vpop.f32.mrf.mxu0
    %v349 = vadd.f32 0.0, %v348
    %350 = vdwg.mxu0
    %v351 = vmul.f32 %v240, 0.2
    %v352 = vmul.f32 %v242, 0.2
    %v353 = vmul.f32 %v329, 0.2
    %v354 = vmul.f32 %v331, 0.2
    %v355 = vmul.f32 %v246, 0.2
    %v356 = vmul.f32 %v248, 0.2
    %v357 = vmul.f32 %v335, 0.2
    %v358 = vmul.f32 %v337, 0.2
    %v359 = vmul.f32 %v252, 0.2
    %v360 = vmul.f32 %v254, 0.2
    %v361 = vmul.f32 %v341, 0.2
    %v362 = vmul.f32 %v343, 0.2
    %v363 = vmul.f32 %v258, 0.2
    %v364 = vmul.f32 %v260, 0.2
    %v365 = vmul.f32 %v347, 0.2
    %v366 = vmul.f32 %v349, 0.2
    %v367 = vmax.f32 %v240, %v351
    %v368 = vmax.f32 %v242, %v352
    %v369 = vmax.f32 %v329, %v353
    %v370 = vmax.f32 %v331, %v354
    %v371 = vmax.f32 %v246, %v355
    %v372 = vmax.f32 %v248, %v356
    %v373 = vmax.f32 %v335, %v357
    %v374 = vmax.f32 %v337, %v358
    %v375 = vmax.f32 %v252, %v359
    %v376 = vmax.f32 %v254, %v360
    %v377 = vmax.f32 %v341, %v361
    %v378 = vmax.f32 %v343, %v362
    %v379 = vmax.f32 %v258, %v363
    %v380 = vmax.f32 %v260, %v364
    %v381 = vmax.f32 %v347, %v365
    %v382 = vmax.f32 %v349, %v366
    %383 = vset.pattern.permute.xlu0 37
    %384 = vperm.xlu0 %383, %v134
    %v385 = vpop.permute.xlu0 %384
    %387 = vset.pattern.permute.xlu0 37
    %388 = vperm.xlu0 %387, %v135
    %v389 = vpop.permute.xlu0 %388
    %391 = vset.pattern.permute.xlu0 37
    %392 = vperm.xlu0 %391, %v136
    %v393 = vpop.permute.xlu0 %392
    %395 = vset.pattern.permute.xlu0 37
    %396 = vperm.xlu0 %395, %v137
    %v397 = vpop.permute.xlu0 %396
    %vm399 = vcmask 261120
    %v400 = vsel %vm399, %v134, 0
    %v402 = vsel %vm399, %v135, 0
    %v404 = vsel %vm399, %v136, 0
    %v406 = vsel %vm399, %v137, 0
    %408 = vmatprep.subr.mxu0 0.0
    %409 = vmatpush1.msra.mxu0 0.0
    %410 = vmatprep.subr.mxu0 0.0
    %411 = vmatpush1.msra.mxu0 0.0
    %412 = vmatprep.subr.mxu0 0.0
    %413 = vmatpush1.msra.mxu0 0.0
    %414 = vmatprep.subr.mxu0 0.0
    %415 = vmatpush1.msra.mxu0 0.0
    %416 = vmatprep.subr.mxu0 0.0
    %417 = vmatpush1.msra.mxu0 0.0
    %418 = vmatprep.subr.mxu0 0.0
    %419 = vmatpush1.msra.mxu0 0.0
    %420 = vmatprep.subr.mxu0 0.0
    %421 = vmatpush1.msra.mxu0 0.0
    %422 = vmatprep.subr.mxu0 0.0
    %423 = vmatpush1.msra.mxu0 0.0
    %424 = vmatprep.subr.mxu0 0.0
    %425 = vmatpush1.msra.mxu0 0.0
    %426 = vmatprep.subr.mxu0 0.0
    %427 = vmatpush1.msra.mxu0 0.0
    %428 = vmatprep.subr.mxu0 0.0
    %429 = vmatpush1.msra.mxu0 0.0
    %430 = vmatprep.subr.mxu0 0.0
    %431 = vmatpush1.msra.mxu0 0.0
    %432 = vmatprep.subr.mxu0 %v380
    %433 = vmatpush1.msra.mxu0 %v379
    %434 = vmatprep.subr.mxu0 %v376
    %435 = vmatpush1.msra.mxu0 %v375
    %436 = vmatprep.subr.mxu0 %v372
    %437 = vmatpush1.msra.mxu0 %v371
    %438 = vmatprep.subr.mxu0 %v368
    %439 = vmatpush1.msra.mxu0 %v367
    %440 = vmatprep.subr.mxu0 0.0
    %441 = vmatpush2.msra.mxu0 0.0
    %442 = vmatprep.subr.mxu0 0.0
    %443 = vmatpush2.msra.mxu0 0.0
    %444 = vmatprep.subr.mxu0 0.0
    %445 = vmatpush2.msra.mxu0 0.0
    %446 = vmatprep.subr.mxu0 0.0
    %447 = vmatpush2.msra.mxu0 0.0
    %448 = vmatprep.subr.mxu0 0.0
    %449 = vmatpush2.msra.mxu0 0.0
    %450 = vmatprep.subr.mxu0 0.0
    %451 = vmatpush2.msra.mxu0 0.0
    %452 = vmatprep.subr.mxu0 0.0
    %453 = vmatpush2.msra.mxu0 0.0
    %454 = vmatprep.subr.mxu0 0.0
    %455 = vmatpush2.msra.mxu0 0.0
    %456 = vmatprep.subr.mxu0 0.0
    %457 = vmatpush2.msra.mxu0 0.0
    %458 = vmatprep.subr.mxu0 0.0
    %459 = vmatpush2.msra.mxu0 0.0
    %460 = vmatprep.subr.mxu0 0.0
    %461 = vmatpush2.msra.mxu0 0.0
    %462 = vmatprep.subr.mxu0 0.0
    %463 = vmatpush2.msra.mxu0 0.0
    %464 = vmatprep.subr.mxu0 0.0
    %465 = vmatpush2.msra.mxu0 0.0
    %466 = vmatprep.subr.mxu0 0.0
    %467 = vmatpush2.msra.mxu0 0.0
    %468 = vmatprep.subr.mxu0 0.0
    %469 = vmatpush2.msra.mxu0 0.0
    %470 = vmatprep.subr.mxu0 0.0
    %471 = vmatpush2.msra.mxu0 0.0
    %472 = vmatprep.mubr.f32.mxu0 0.0
    %473 = vmatmul.mubr.f32.gmra.mxu0 %v400
    %v474 = vpop.f32.mrf.mxu0
    %v475 = vadd.f32 %v385, %v474
    %v476 = vpop.f32.mrf.mxu0
    %v477 = vadd.f32 %v385, %v476
    %478 = vmatprep.mubr.f32.mxu0 0.0
    %479 = vmatmul.mubr.f32.gmra.mxu0 %v402
    %v480 = vpop.f32.mrf.mxu0
    %v481 = vadd.f32 %v389, %v480
    %v482 = vpop.f32.mrf.mxu0
    %v483 = vadd.f32 %v389, %v482
    %484 = vmatprep.mubr.f32.mxu0 0.0
    %485 = vmatmul.mubr.f32.gmra.mxu0 %v404
    %v486 = vpop.f32.mrf.mxu0
    %v487 = vadd.f32 %v393, %v486
    %v488 = vpop.f32.mrf.mxu0
    %v489 = vadd.f32 %v393, %v488
    %490 = vmatprep.mubr.f32.mxu0 0.0
    %491 = vmatmul.mubr.f32.gmra.mxu0 %v406
    %v492 = vpop.f32.mrf.mxu0
    %v493 = vadd.f32 %v397, %v492
    %v494 = vpop.f32.mrf.mxu0
    %v495 = vadd.f32 %v397, %v494
    %496 = vdwg.mxu0
    %497 = vmatprep.subr.mxu0 0.0
    %498 = vmatpush1.msra.mxu0 0.0
    %499 = vmatprep.subr.mxu0 0.0
    %500 = vmatpush1.msra.mxu0 0.0
    %501 = vmatprep.subr.mxu0 0.0
    %502 = vmatpush1.msra.mxu0 0.0
    %503 = vmatprep.subr.mxu0 0.0
    %504 = vmatpush1.msra.mxu0 0.0
    %505 = vmatprep.subr.mxu0 0.0
    %506 = vmatpush1.msra.mxu0 0.0
    %507 = vmatprep.subr.mxu0 0.0
    %508 = vmatpush1.msra.mxu0 0.0
    %509 = vmatprep.subr.mxu0 0.0
    %510 = vmatpush1.msra.mxu0 0.0
    %511 = vmatprep.subr.mxu0 0.0
    %512 = vmatpush1.msra.mxu0 0.0
    %513 = vmatprep.subr.mxu0 0.0
    %514 = vmatpush1.msra.mxu0 0.0
    %515 = vmatprep.subr.mxu0 0.0
    %516 = vmatpush1.msra.mxu0 0.0
    %517 = vmatprep.subr.mxu0 0.0
    %518 = vmatpush1.msra.mxu0 0.0
    %519 = vmatprep.subr.mxu0 0.0
    %520 = vmatpush1.msra.mxu0 0.0
    %521 = vmatprep.subr.mxu0 %v382
    %522 = vmatpush1.msra.mxu0 %v381
    %523 = vmatprep.subr.mxu0 %v378
    %524 = vmatpush1.msra.mxu0 %v377
    %525 = vmatprep.subr.mxu0 %v374
    %526 = vmatpush1.msra.mxu0 %v373
    %527 = vmatprep.subr.mxu0 %v370
    %528 = vmatpush1.msra.mxu0 %v369
    %529 = vmatprep.subr.mxu0 0.0
    %530 = vmatpush2.msra.mxu0 0.0
    %531 = vmatprep.subr.mxu0 0.0
    %532 = vmatpush2.msra.mxu0 0.0
    %533 = vmatprep.subr.mxu0 0.0
    %534 = vmatpush2.msra.mxu0 0.0
    %535 = vmatprep.subr.mxu0 0.0
    %536 = vmatpush2.msra.mxu0 0.0
    %537 = vmatprep.subr.mxu0 0.0
    %538 = vmatpush2.msra.mxu0 0.0
    %539 = vmatprep.subr.mxu0 0.0
    %540 = vmatpush2.msra.mxu0 0.0
    %541 = vmatprep.subr.mxu0 0.0
    %542 = vmatpush2.msra.mxu0 0.0
    %543 = vmatprep.subr.mxu0 0.0
    %544 = vmatpush2.msra.mxu0 0.0
    %545 = vmatprep.subr.mxu0 0.0
    %546 = vmatpush2.msra.mxu0 0.0
    %547 = vmatprep.subr.mxu0 0.0
    %548 = vmatpush2.msra.mxu0 0.0
    %549 = vmatprep.subr.mxu0 0.0
    %550 = vmatpush2.msra.mxu0 0.0
    %551 = vmatprep.subr.mxu0 0.0
    %552 = vmatpush2.msra.mxu0 0.0
    %553 = vmatprep.subr.mxu0 0.0
    %554 = vmatpush2.msra.mxu0 0.0
    %555 = vmatprep.subr.mxu0 0.0
    %556 = vmatpush2.msra.mxu0 0.0
    %557 = vmatprep.subr.mxu0 0.0
    %558 = vmatpush2.msra.mxu0 0.0
    %559 = vmatprep.subr.mxu0 0.0
    %560 = vmatpush2.msra.mxu0 0.0
    %561 = vmatprep.mubr.f32.mxu0 0.0
    %562 = vmatmul.mubr.f32.gmra.mxu0 %v400
    %v563 = vpop.f32.mrf.mxu0
    %v564 = vadd.f32 %v385, %v563
    %v565 = vpop.f32.mrf.mxu0
    %v566 = vadd.f32 %v385, %v565
    %567 = vmatprep.mubr.f32.mxu0 0.0
    %568 = vmatmul.mubr.f32.gmra.mxu0 %v402
    %v569 = vpop.f32.mrf.mxu0
    %v570 = vadd.f32 %v389, %v569
    %v571 = vpop.f32.mrf.mxu0
    %v572 = vadd.f32 %v389, %v571
    %573 = vmatprep.mubr.f32.mxu0 0.0
    %574 = vmatmul.mubr.f32.gmra.mxu0 %v404
    %v575 = vpop.f32.mrf.mxu0
    %v576 = vadd.f32 %v393, %v575
    %v577 = vpop.f32.mrf.mxu0
    %v578 = vadd.f32 %v393, %v577
    %579 = vmatprep.mubr.f32.mxu0 0.0
    %580 = vmatmul.mubr.f32.gmra.mxu0 %v406
    %v581 = vpop.f32.mrf.mxu0
    %v582 = vadd.f32 %v397, %v581
    %v583 = vpop.f32.mrf.mxu0
    %v584 = vadd.f32 %v397, %v583
    %585 = vdwg.mxu0
    %v586 = vmul.f32 %v475, 0.2
    %v587 = vmul.f32 %v477, 0.2
    %v588 = vmul.f32 %v564, 0.2
    %v589 = vmul.f32 %v566, 0.2
    %v590 = vmul.f32 %v481, 0.2
    %v591 = vmul.f32 %v483, 0.2
    %v592 = vmul.f32 %v570, 0.2
    %v593 = vmul.f32 %v572, 0.2
    %v594 = vmul.f32 %v487, 0.2
    %v595 = vmul.f32 %v489, 0.2
    %v596 = vmul.f32 %v576, 0.2
    %v597 = vmul.f32 %v578, 0.2
    %v598 = vmul.f32 %v493, 0.2
    %v599 = vmul.f32 %v495, 0.2
    %v600 = vmul.f32 %v582, 0.2
    %v601 = vmul.f32 %v584, 0.2
    %v602 = vmax.f32 %v475, %v586
    %v603 = vmax.f32 %v477, %v587
    %v604 = vmax.f32 %v564, %v588
    %v605 = vmax.f32 %v566, %v589
    %v606 = vmax.f32 %v481, %v590
    %v607 = vmax.f32 %v483, %v591
    %v608 = vmax.f32 %v570, %v592
    %v609 = vmax.f32 %v572, %v593
    %v610 = vmax.f32 %v487, %v594
    %v611 = vmax.f32 %v489, %v595
    %v612 = vmax.f32 %v576, %v596
    %v613 = vmax.f32 %v578, %v597
    %v614 = vmax.f32 %v493, %v598
    %v615 = vmax.f32 %v495, %v599
    %v616 = vmax.f32 %v582, %v600
    %v617 = vmax.f32 %v584, %v601
    %619 = vset.pattern.permute.xlu0 32
    %620 = vperm.xlu0 %619, %v138
    %v621 = vpop.permute.xlu0 %620
    %v623 = vsel %vm399, %v138, 0
    %625 = vmatprep.subr.mxu0 0.0
    %626 = vmatpush1.msra.mxu0 0.0
    %627 = vmatprep.subr.mxu0 0.0
    %628 = vmatpush1.msra.mxu0 0.0
    %629 = vmatprep.subr.mxu0 0.0
    %630 = vmatpush1.msra.mxu0 0.0
    %631 = vmatprep.subr.mxu0 0.0
    %632 = vmatpush1.msra.mxu0 0.0
    %633 = vmatprep.subr.mxu0 0.0
    %634 = vmatpush1.msra.mxu0 0.0
    %635 = vmatprep.subr.mxu0 0.0
    %636 = vmatpush1.msra.mxu0 0.0
    %637 = vmatprep.subr.mxu0 0.0
    %638 = vmatpush1.msra.mxu0 0.0
    %639 = vmatprep.subr.mxu0 0.0
    %640 = vmatpush1.msra.mxu0 0.0
    %641 = vmatprep.subr.mxu0 0.0
    %642 = vmatpush1.msra.mxu0 0.0
    %643 = vmatprep.subr.mxu0 0.0
    %644 = vmatpush1.msra.mxu0 0.0
    %645 = vmatprep.subr.mxu0 0.0
    %646 = vmatpush1.msra.mxu0 0.0
    %647 = vmatprep.subr.mxu0 0.0
    %648 = vmatpush1.msra.mxu0 0.0
    %649 = vmatprep.subr.mxu0 %v615
    %650 = vmatpush1.msra.mxu0 %v614
    %651 = vmatprep.subr.mxu0 %v611
    %652 = vmatpush1.msra.mxu0 %v610
    %653 = vmatprep.subr.mxu0 %v607
    %654 = vmatpush1.msra.mxu0 %v606
    %655 = vmatprep.subr.mxu0 %v603
    %656 = vmatpush1.msra.mxu0 %v602
    %657 = vmatprep.subr.mxu0 0.0
    %658 = vmatpush2.msra.mxu0 0.0
    %659 = vmatprep.subr.mxu0 0.0
    %660 = vmatpush2.msra.mxu0 0.0
    %661 = vmatprep.subr.mxu0 0.0
    %662 = vmatpush2.msra.mxu0 0.0
    %663 = vmatprep.subr.mxu0 0.0
    %664 = vmatpush2.msra.mxu0 0.0
    %665 = vmatprep.subr.mxu0 0.0
    %666 = vmatpush2.msra.mxu0 0.0
    %667 = vmatprep.subr.mxu0 0.0
    %668 = vmatpush2.msra.mxu0 0.0
    %669 = vmatprep.subr.mxu0 0.0
    %670 = vmatpush2.msra.mxu0 0.0
    %671 = vmatprep.subr.mxu0 0.0
    %672 = vmatpush2.msra.mxu0 0.0
    %673 = vmatprep.subr.mxu0 0.0
    %674 = vmatpush2.msra.mxu0 0.0
    %675 = vmatprep.subr.mxu0 0.0
    %676 = vmatpush2.msra.mxu0 0.0
    %677 = vmatprep.subr.mxu0 0.0
    %678 = vmatpush2.msra.mxu0 0.0
    %679 = vmatprep.subr.mxu0 0.0
    %680 = vmatpush2.msra.mxu0 0.0
    %681 = vmatprep.subr.mxu0 0.0
    %682 = vmatpush2.msra.mxu0 0.0
    %683 = vmatprep.subr.mxu0 0.0
    %684 = vmatpush2.msra.mxu0 0.0
    %685 = vmatprep.subr.mxu0 0.0
    %686 = vmatpush2.msra.mxu0 0.0
    %687 = vmatprep.subr.mxu0 0.0
    %688 = vmatpush2.msra.mxu0 0.0
    %689 = vmatprep.mubr.f32.mxu0 0.0
    %690 = vmatmul.mubr.f32.gmra.mxu0 %v623
    %v691 = vpop.f32.mrf.mxu0
    %v692 = vadd.f32 %v621, %v691
    %v693 = vpop.f32.mrf.mxu0
    %v694 = vadd.f32 %v621, %v693
    %695 = vdwg.mxu0
    %696 = vmatprep.subr.mxu0 0.0
    %697 = vmatpush1.msra.mxu0 0.0
    %698 = vmatprep.subr.mxu0 0.0
    %699 = vmatpush1.msra.mxu0 0.0
    %700 = vmatprep.subr.mxu0 0.0
    %701 = vmatpush1.msra.mxu0 0.0
    %702 = vmatprep.subr.mxu0 0.0
    %703 = vmatpush1.msra.mxu0 0.0
    %704 = vmatprep.subr.mxu0 0.0
    %705 = vmatpush1.msra.mxu0 0.0
    %706 = vmatprep.subr.mxu0 0.0
    %707 = vmatpush1.msra.mxu0 0.0
    %708 = vmatprep.subr.mxu0 0.0
    %709 = vmatpush1.msra.mxu0 0.0
    %710 = vmatprep.subr.mxu0 0.0
    %711 = vmatpush1.msra.mxu0 0.0
    %712 = vmatprep.subr.mxu0 0.0
    %713 = vmatpush1.msra.mxu0 0.0
    %714 = vmatprep.subr.mxu0 0.0
    %715 = vmatpush1.msra.mxu0 0.0
    %716 = vmatprep.subr.mxu0 0.0
    %717 = vmatpush1.msra.mxu0 0.0
    %718 = vmatprep.subr.mxu0 0.0
    %719 = vmatpush1.msra.mxu0 0.0
    %720 = vmatprep.subr.mxu0 %v617
    %721 = vmatpush1.msra.mxu0 %v616
    %722 = vmatprep.subr.mxu0 %v613
    %723 = vmatpush1.msra.mxu0 %v612
    %724 = vmatprep.subr.mxu0 %v609
    %725 = vmatpush1.msra.mxu0 %v608
    %726 = vmatprep.subr.mxu0 %v605
    %727 = vmatpush1.msra.mxu0 %v604
    %728 = vmatprep.subr.mxu0 0.0
    %729 = vmatpush2.msra.mxu0 0.0
    %730 = vmatprep.subr.mxu0 0.0
    %731 = vmatpush2.msra.mxu0 0.0
    %732 = vmatprep.subr.mxu0 0.0
    %733 = vmatpush2.msra.mxu0 0.0
    %734 = vmatprep.subr.mxu0 0.0
    %735 = vmatpush2.msra.mxu0 0.0
    %736 = vmatprep.subr.mxu0 0.0
    %737 = vmatpush2.msra.mxu0 0.0
    %738 = vmatprep.subr.mxu0 0.0
    %739 = vmatpush2.msra.mxu0 0.0
    %740 = vmatprep.subr.mxu0 0.0
    %741 = vmatpush2.msra.mxu0 0.0
    %742 = vmatprep.subr.mxu0 0.0
    %743 = vmatpush2.msra.mxu0 0.0
    %744 = vmatprep.subr.mxu0 0.0
    %745 = vmatpush2.msra.mxu0 0.0
    %746 = vmatprep.subr.mxu0 0.0
    %747 = vmatpush2.msra.mxu0 0.0
    %748 = vmatprep.subr.mxu0 0.0
    %749 = vmatpush2.msra.mxu0 0.0
    %750 = vmatprep.subr.mxu0 0.0
    %751 = vmatpush2.msra.mxu0 0.0
    %752 = vmatprep.subr.mxu0 0.0
    %753 = vmatpush2.msra.mxu0 0.0
    %754 = vmatprep.subr.mxu0 0.0
    %755 = vmatpush2.msra.mxu0 0.0
    %756 = vmatprep.subr.mxu0 0.0
    %757 = vmatpush2.msra.mxu0 0.0
    %758 = vmatprep.subr.mxu0 0.0
    %759 = vmatpush2.msra.mxu0 0.0
    %760 = vmatprep.mubr.f32.mxu0 0.0
    %761 = vmatmul.mubr.f32.gmra.mxu0 %v623
    %v762 = vpop.f32.mrf.mxu0
    %v763 = vadd.f32 %v621, %v762
    %v764 = vpop.f32.mrf.mxu0
    %v765 = vadd.f32 %v621, %v764
    %766 = vdwg.mxu0
    %v767 = vxor.u32 %v692, 2147483648
    %v768 = vxor.u32 %v694, 2147483648
    %v769 = vxor.u32 %v763, 2147483648
    %v770 = vxor.u32 %v765, 2147483648
    %v771 = vmul.f32 %v767, 1.442695
    %v772 = vpow.pop %v771
    %v773 = vmul.f32 %v768, 1.442695
    %v774 = vpow.pop %v773
    %v775 = vmul.f32 %v769, 1.442695
    %v776 = vpow.pop %v775
    %v777 = vmul.f32 %v770, 1.442695
    %v778 = vpow.pop %v777
    %v779 = vadd.f32 %v772, 1.0
    %v780 = vadd.f32 %v774, 1.0
    %v781 = vadd.f32 %v776, 1.0
    %v782 = vadd.f32 %v778, 1.0
    %v783 = vrcp.pop %v779
    %v784 = vmul.f32 1.0, %v783
    %v785 = vrcp.pop %v780
    %v786 = vmul.f32 1.0, %v785
    %v787 = vrcp.pop %v781
    %v788 = vmul.f32 1.0, %v787
    %v789 = vrcp.pop %v782
    %v790 = vmul.f32 1.0, %v789
    %v795 = vcombine.low %v784, %v786
    %v796 = vcombine.low %v788, %v790
    %v798 = vunpack.c.l.s4 1966171168
    %v799 = vunpack.c.0.s8 %v798
    %v800 = vlaneseq
    %v801 = vshrl.u32 %v800, 7
    %v802 = vsub.s32 %v799, %v801
    %v803 = vrot.slane %v795, %v802
    %v805 = vunpack.c.l.s4 1966171168
    %v806 = vunpack.c.0.s8 %v805
    %v807 = vlaneseq
    %v808 = vshrl.u32 %v807, 7
    %v809 = vsub.s32 %v806, %v808
    %v810 = vrot.slane %v796, %v809
    %v811 = vcombine.low %v803, %v810
    %v813 = vunpack.c.l.s4 1966171168
    %v814 = vunpack.c.0.s8 %v813
    %v815 = vlaneseq
    %v816 = vshrl.u32 %v815, 7
    %v817 = vsub.s32 %v814, %v816
    %v818 = vrot.slane %v811, %v817
    %v820 = vlaneseq
    %vm821 = vcmp.ge.s32.totalorder %v820, 0
    %vm822 = vcmp.lt.s32.totalorder %v820, 512
    %vm823 = vmand %vm821, %vm822
    %824 = vst.msk [vmem:[#allocation7] sm:$0xf] %vm823, %v818
    // Predicated region
    $region18: #{tpu_custom_call.1} parent=1 // pred_check
      _
    $region19: #{tpu_custom_call.1} parent=1 // pred_check_branch
      %826 = sbr.rel (0) target = $region21
    $region20: #{tpu_custom_call.1} parent=1 // pred_region
      %s828 = ssub.s32 64, 64
      %829 = vsyncadd [#allocation4], %s828
      %s831 = sshll.u32 [#allocation7], 4
      %s832 = int_to_ptr.vmem [resolvable:$true] %s831
      %834 = dma.vmem_to_hbm [thread:$0]  %s832, 64, %s2, [#allocation4]
    $region21: #{tpu_custom_call.1} parent=1 // pred_fallthru
      _
    // Predicated region
    $region22: #{tpu_custom_call.1} parent=1 // pred_check
      _
    $region23: #{tpu_custom_call.1} parent=1 // pred_check_branch
      %836 = sbr.rel (0) target = $region25
    $region24: #{tpu_custom_call.1} parent=1 // pred_region
      %837 = dma.done [#allocation4], 64
    $region25: #{tpu_custom_call.1} parent=1 // pred_fallthru
      _
    %838 = vsyncpa [#allocation3], 1
    %839 = vsyncpa [#allocation6], 1
    %840 = vsyncpa [#allocation4], 1

</llo_original>
